<compile_context>
chip_gen: v6e
topology: v6e:2x2x1
jax: 0.10.0
libtpu: 0.0.40
codegen_flags: <defaults>
</compile_context>

<pallas_src>
import functools

import jax
import jax.numpy as jnp
from jax import lax
from jax.experimental import pallas as pl
from jax.experimental.pallas import tpu as pltpu


# ----------------------------- helpers -----------------------------

def _row_tile(rows, cap=512):
    """Row tile: whole slab if small, else a fixed 512-row tile + cdiv grid.
    (512 ~ 85% of HBM roofline on v5e/v6e; still fits v7x 64 MiB with bf16 weights.)"""
    return rows if rows <= cap else cap


def _col_tile(cols, cap=1024):
    """Column / hidden-dim tile that exactly divides `cols` (multiple of 128)."""
    if cols <= cap:
        return cols
    for t in (1024, 512, 256, 128):
        if t <= cap and cols % t == 0:
            return t
    return cols  # TODO(synk): non-128-multiple wide dims fall back to a single block


def _cparams(*semantics):
    # Explicit VMEM limit: v5e's default scoped VMEM is only 16 MiB.
    return pltpu.CompilerParams(dimension_semantics=semantics,
                                vmem_limit_bytes=64 * 1024 * 1024)


# ----------------------------- kernel 1: LN1 + QKVW projection -----------------------------

def _ln_qkvw_kernel(x_ref, g_ref, b_ref, w_ref, xln_ref, qkvw_ref, xln_sc, *, eps):
    # LN is computed once per row tile (at the first output-column step) and kept
    # in a bf16 scratch for the streamed weight-column matmuls.
    @pl.when(pl.program_id(1) == 0)
    def _():
        x = x_ref[...].astype(jnp.float32)
        mean = jnp.mean(x, axis=-1, keepdims=True)
        xc = x - mean
        var = jnp.mean(xc * xc, axis=-1, keepdims=True)
        xln = (xc * lax.rsqrt(var + eps)) * g_ref[...] + b_ref[...]
        xln_ref[...] = xln.astype(xln_ref.dtype)
        xln_sc[...] = xln.astype(xln_sc.dtype)

    qkvw_ref[...] = jnp.dot(xln_sc[...], w_ref[...],
                            preferred_element_type=jnp.float32).astype(qkvw_ref.dtype)


def ln_qkvw(x2d, gamma, beta, w_qkvw, eps=1e-5, compute_dtype=jnp.bfloat16):
    R, F = x2d.shape
    F4 = w_qkvw.shape[1]
    tm = _row_tile(R)
    tn = _col_tile(F4)
    grid = (pl.cdiv(R, tm), F4 // tn)
    return pl.pallas_call(
        functools.partial(_ln_qkvw_kernel, eps=eps),
        out_shape=(jax.ShapeDtypeStruct((R, F), x2d.dtype),       # x_ln (f32 residual base)
                   jax.ShapeDtypeStruct((R, F4), compute_dtype)),  # qkvw (bf16, re-read twice)
        grid=grid,
        in_specs=[pl.BlockSpec((tm, F), lambda i, j: (i, 0)),
                  pl.BlockSpec((1, F), lambda i, j: (0, 0)),
                  pl.BlockSpec((1, F), lambda i, j: (0, 0)),
                  pl.BlockSpec((F, tn), lambda i, j: (0, j))],
        out_specs=(pl.BlockSpec((tm, F), lambda i, j: (i, 0)),
                   pl.BlockSpec((tm, tn), lambda i, j: (i, j))),
        scratch_shapes=[pltpu.VMEM((tm, F), compute_dtype)],
        compiler_params=_cparams("parallel", "arbitrary"),
    )(x2d, gamma.reshape(1, -1), beta.reshape(1, -1), w_qkvw)


# ----------------------------- kernel 2: per-head memory similarities -----------------------------

def _mem_sims_kernel(q_ref, k_ref, o_ref):
    # raw inner products (faiss IndexFlatIP): contract on last axes, no .T copy
    o_ref[0] = lax.dot_general(q_ref[0], k_ref[0], (((1,), (1,)), ((), ())),
                               preferred_element_type=jnp.float32)


def mem_sims(q_hR, k_hR):
    H, R, hd = q_hR.shape
    tq = _row_tile(R)
    grid = (H, pl.cdiv(R, tq))
    return pl.pallas_call(
        _mem_sims_kernel,
        out_shape=jax.ShapeDtypeStruct((H, R, R), jnp.float32),
        grid=grid,
        in_specs=[pl.BlockSpec((1, tq, hd), lambda h, i: (h, i, 0)),
                  pl.BlockSpec((1, R, hd), lambda h, i: (h, 0, 0))],
        out_specs=pl.BlockSpec((1, tq, R), lambda h, i: (h, i, 0)),
        compiler_params=_cparams("parallel", "parallel"),
    )(q_hR, k_hR)


def memory_lookup(q_hR, k_hR, v_hR, B, N, H, hd, memory_size, items_per_query):
    """FIFO KV-memory (all-zero memory, then B*N freshly inserted keys) lookup.

    Returns head-major k_m, v_m of shape (B, H, N*items_per_query, hd); same
    per-head items as the reference rearrange 'h (b m) hd -> b m (h hd)'.
    """
    R = B * N
    off = memory_size - R            # remaining (all-zero) FIFO slots
    i = items_per_query

    sims_live = mem_sims(q_hR, k_hR)                         # (H, R, R) f32

    # Avoid materializing the (H, R, memory_size) zero-padded score slab.
    # Zero slots score exactly 0 and win ties (lower memory index), so a live
    # candidate survives the combined top-k iff its inner product is > 0.
    if off == 0:
        _, idx = lax.top_k(sims_live, i)                     # (H, R, i)
        keep = None
    elif off >= i:
        vals, idx = lax.top_k(sims_live, i)
        keep = vals > 0.0
    else:  # 0 < off < i : tiny zero pad, exact combined top-k
        sims = jnp.concatenate(
            [jnp.zeros((H, R, off), sims_live.dtype), sims_live], axis=-1)
        _, idx = lax.top_k(sims, i)
        keep = idx >= off
        idx = jnp.clip(idx - off, 0, R - 1)

    # TODO(synk): lax.top_k tie-breaking among equal inner products may differ from
    # faiss IndexFlatIP; gathered (zero) keys/values are identical either way.
    # TODO(synk): the top-k-driven row gather stays in XLA; a scalar-prefetch DMA
    # gather kernel would be the next step for very large B*N.
    gather = jax.vmap(lambda mem, ix: mem[ix])               # (R,hd)[(R,i)] -> (R,i,hd)
    k_sel = gather(k_hR, idx)
    v_sel = gather(v_hR, idx)
    if keep is not None:
        k_sel = jnp.where(keep[..., None], k_sel, 0)
        v_sel = jnp.where(keep[..., None], v_sel, 0)

    Mi = N * i
    km_bh = k_sel.reshape(H, B, Mi, hd).transpose(1, 0, 2, 3)   # (B, H, Mi, hd)
    vm_bh = v_sel.reshape(H, B, Mi, hd).transpose(1, 0, 2, 3)
    return km_bh, vm_bh


# ----------------------------- kernel 3: fused MABlock attention -----------------------------

def _mablock_kernel(xln_ref, gate_ref, q_ref, k_ref, v_ref, km_ref, vm_ref,
                    wo_ref, bo_ref, o_ref, cat_sc, *, H, hd, scale):
    q = q_ref[0]                                   # (H, tq, hd) bf16, head-major
    wo = wo_ref[...]                               # (F, F) bf16
    bo = bo_ref[...].astype(jnp.float32)           # (1, F)

    def attend_and_project(k, v):
        # Heads batched through a single einsum pair (MXU pipelines heads
        # back-to-back; no per-head Python matmul loop).
        sim = jnp.einsum('hqd,hkd->hqk', q, k,
                         preferred_element_type=jnp.float32) * scale
        sim = sim - jnp.max(sim, axis=-1, keepdims=True)
        p = jnp.exp(sim)
        inv = pl.reciprocal(jnp.sum(p, axis=-1, keepdims=True), approx=True)
        o = jnp.einsum('hqk,hkd->hqd', (p * inv).astype(v.dtype), v,
                       preferred_element_type=jnp.float32)       # (H, tq, hd) f32
        # Head concat into a lane-dense (tq, F) scratch (one static column-block
        # store per head), then ONE K=F to_out matmul at full MXU occupancy
        # instead of H rank-hd matmuls.
        for h in range(H):
            cat_sc[:, h * hd:(h + 1) * hd] = o[h]
        return jnp.dot(cat_sc[...].astype(wo.dtype), wo,
                       preferred_element_type=jnp.float32) + bo

    a = attend_and_project(k_ref[0], v_ref[0])       # self-attention branch
    a_m = attend_and_project(km_ref[0], vm_ref[0])   # memory-attention branch

    g = jax.nn.sigmoid(gate_ref[0].astype(jnp.float32))
    o_ref[0] = (xln_ref[0].astype(jnp.float32)
                + g * a + (1.0 - g) * a_m).astype(o_ref.dtype)


def mablock_attention(x_ln3, gate3, q_bh, k_bh, v_bh, km_bh, vm_bh, wo, bo,
                      *, H, hd):
    B, N, F = x_ln3.shape
    Mi = km_bh.shape[2]
    tq = _row_tile(N)
    scale = hd ** -0.5
    grid = (B, pl.cdiv(N, tq))
    return pl.pallas_call(
        functools.partial(_mablock_kernel, H=H, hd=hd, scale=scale),
        out_shape=jax.ShapeDtypeStruct((B, N, F), x_ln3.dtype),
        grid=grid,
        in_specs=[pl.BlockSpec((1, tq, F), lambda b, i: (b, i, 0)),      # x_ln
                  pl.BlockSpec((1, tq, F), lambda b, i: (b, i, 0)),      # gate (w proj)
                  pl.BlockSpec((1, H, tq, hd), lambda b, i: (b, 0, i, 0)),  # q (head-major)
                  pl.BlockSpec((1, H, N, hd), lambda b, i: (b, 0, 0, 0)),   # k
                  pl.BlockSpec((1, H, N, hd), lambda b, i: (b, 0, 0, 0)),   # v
                  pl.BlockSpec((1, H, Mi, hd), lambda b, i: (b, 0, 0, 0)),  # k_mem
                  pl.BlockSpec((1, H, Mi, hd), lambda b, i: (b, 0, 0, 0)),  # v_mem
                  pl.BlockSpec((F, F), lambda b, i: (0, 0)),             # wo
                  pl.BlockSpec((1, F), lambda b, i: (0, 0))],            # bo
        out_specs=pl.BlockSpec((1, tq, F), lambda b, i: (b, i, 0)),
        scratch_shapes=[pltpu.VMEM((tq, F), jnp.float32)],
        compiler_params=_cparams("parallel", "parallel"),
    )(x_ln3, gate3, q_bh, k_bh, v_bh, km_bh, vm_bh, wo, bo.reshape(1, -1))


# ----------------------------- kernel 4: fused FFN + residual -----------------------------

def _ffn_kernel(x_ref, g_ref, b_ref, w1_ref, b1_ref, w2_ref, b2_ref, o_ref,
                xln_sc, acc_sc, *, eps):
    # Hidden dim tiled as the (arbitrary, innermost) k axis with a f32 VMEM
    # accumulator: w1/w2 never need to be fully VMEM-resident (v7x 64 MiB safe).
    @pl.when(pl.program_id(1) == 0)
    def _():
        x = x_ref[...].astype(jnp.float32)
        mean = jnp.mean(x, axis=-1, keepdims=True)
        xc = x - mean
        var = jnp.mean(xc * xc, axis=-1, keepdims=True)
        xln = (xc * lax.rsqrt(var + eps)) * g_ref[...] + b_ref[...]
        xln_sc[...] = xln.astype(xln_sc.dtype)
        acc_sc[...] = jnp.zeros_like(acc_sc)

    h = jnp.dot(xln_sc[...], w1_ref[...],
                preferred_element_type=jnp.float32) + b1_ref[...]
    # exact (erf) GELU == torch.nn.GELU() default
    h = 0.5 * h * (1.0 + lax.erf(h * 0.7071067811865476))
    acc_sc[...] += jnp.dot(h.astype(w2_ref.dtype), w2_ref[...],
                           preferred_element_type=jnp.float32)

    @pl.when(pl.program_id(1) == pl.num_programs(1) - 1)
    def _():
        o_ref[...] = (x_ref[...].astype(jnp.float32) + acc_sc[...]
                      + b2_ref[...]).astype(o_ref.dtype)


def ffn_residual(x2d, gamma, beta, w1, b1, w2, b2, eps=1e-5):
    R, F = x2d.shape
    Fh = w1.shape[1]
    tm = _row_tile(R)
    tkh = _col_tile(Fh)
    grid = (pl.cdiv(R, tm), Fh // tkh)
    return pl.pallas_call(
        functools.partial(_ffn_kernel, eps=eps),
        out_shape=jax.ShapeDtypeStruct((R, F), x2d.dtype),
        grid=grid,
        in_specs=[pl.BlockSpec((tm, F), lambda i, k: (i, 0)),
                  pl.BlockSpec((1, F), lambda i, k: (0, 0)),
                  pl.BlockSpec((1, F), lambda i, k: (0, 0)),
                  pl.BlockSpec((F, tkh), lambda i, k: (0, k)),
                  pl.BlockSpec((1, tkh), lambda i, k: (0, k)),
                  pl.BlockSpec((tkh, F), lambda i, k: (k, 0)),
                  pl.BlockSpec((1, F), lambda i, k: (0, 0))],
        out_specs=pl.BlockSpec((tm, F), lambda i, k: (i, 0)),
        scratch_shapes=[pltpu.VMEM((tm, F), jnp.bfloat16),
                        pltpu.VMEM((tm, F), jnp.float32)],
        compiler_params=_cparams("parallel", "arbitrary"),
    )(x2d, gamma.reshape(1, -1), beta.reshape(1, -1),
      w1, b1.reshape(1, -1), w2, b2.reshape(1, -1))


# ----------------------------- model wrapper -----------------------------

def memoformer_block(x, params, memory_size, items_per_query, H,
                     compute_dtype=jnp.bfloat16):
    B, N, F = x.shape
    R = B * N
    if F % H != 0:
        raise ValueError("features must be divisible by num_heads")
    hd = F // H
    if memory_size < R:
        raise ValueError("memory_size must be >= B*N (FIFO inserts B*N keys per head)")

    x2d = x.reshape(R, F)
    # weights stored/streamed as bf16 (MXU-native); biases & LN params stay f32
    w_qkvw = jnp.concatenate(
        [params["wq"], params["wk"], params["wv"], params["ww"]],
        axis=1).astype(compute_dtype)                                   # (F, 4F)

    # (1) x = LN(x); fused with the four (no-bias) projections
    x_ln, qkvw = ln_qkvw(x2d, params["ln1_g"], params["ln1_b"], w_qkvw,
                         compute_dtype=compute_dtype)

    # head-major layout plumbing done ONCE in the wrapper (no in-kernel hd-wide slices)
    q2d, k2d = qkvw[:, 0 * F:1 * F], qkvw[:, 1 * F:2 * F]
    v2d, w2d = qkvw[:, 2 * F:3 * F], qkvw[:, 3 * F:4 * F]

    def to_bh(t):                              # (R, F) -> (B, H, N, hd)
        return t.reshape(B, N, H, hd).transpose(0, 2, 1, 3)

    q_bh, k_bh, v_bh = to_bh(q2d), to_bh(k2d), to_bh(v2d)
    q_hR = q_bh.transpose(1, 0, 2, 3).reshape(H, R, hd)
    k_hR = k_bh.transpose(1, 0, 2, 3).reshape(H, R, hd)
    v_hR = v_bh.transpose(1, 0, 2, 3).reshape(H, R, hd)

    # (2) KV-memory lookup (scores in Pallas; top-k + gather in XLA)
    km_bh, vm_bh = memory_lookup(q_hR, k_hR, v_hR, B, N, H, hd,
                                 memory_size, items_per_query)

    # (3) x = x + MABlock(x): self-attn + memory-attn + to_out + gate + residual
    x2 = mablock_attention(x_ln.reshape(B, N, F), w2d.reshape(B, N, F),
                           q_bh, k_bh, v_bh, km_bh, vm_bh,
                           params["wo"].astype(compute_dtype), params["bo"],
                           H=H, hd=hd)

    # (4) x = x + FFN(x): LN2 -> Linear + GELU -> Linear -> residual
    out = ffn_residual(x2.reshape(R, F), params["ln2_g"], params["ln2_b"],
                       params["w1"].astype(compute_dtype), params["b1"],
                       params["w2"].astype(compute_dtype), params["b2"])
    return out.reshape(B, N, F)


# ----------------------------- main -----------------------------

if __name__ == "__main__":
    B, N, F = 2, 8, 32
    H = 4
    items_per_query = 2
    mlp_mult = 4

    key = jax.random.PRNGKey(0)
    ks = jax.random.split(key, 12)

    def w_init(k, shape, scale=0.05):
        return jax.random.normal(k, shape, jnp.float32) * scale

    params = {
        "ln1_g": jnp.ones((F,), jnp.float32),
        "ln1_b": jnp.zeros((F,), jnp.float32),
        # MABlock projections (no bias), stored as (in, out)
        "wq": w_init(ks[0], (F, F)),
        "wk": w_init(ks[1], (F, F)),
        "wv": w_init(ks[2], (F, F)),
        "ww": w_init(ks[3], (F, F)),
        # AttentionBase.to_out (with bias)
        "wo": w_init(ks[4], (F, F)),
        "bo": w_init(ks[5], (F,), 0.01),
        # FeedForwardBlock
        "ln2_g": jnp.ones((F,), jnp.float32),
        "ln2_b": jnp.zeros((F,), jnp.float32),
        "w1": w_init(ks[6], (F, F * mlp_mult)),
        "b1": w_init(ks[7], (F * mlp_mult,), 0.01),
        "w2": w_init(ks[8], (F * mlp_mult, F)),
        "b2": w_init(ks[9], (F,), 0.01),
    }

    x = jax.random.normal(ks[10], (B, N, F), jnp.float32)

    # exercise both memory-lookup paths: memory exactly full (off == 0) and
    # memory larger than the inserted keys (off >= items_per_query)
    for memory_size in (32, 64):
        out = memoformer_block(x, params, memory_size, items_per_query, H)
        out = jax.block_until_ready(out)
        assert out.shape == (B, N, F), out.shape
        assert bool(jnp.all(jnp.isfinite(out)))

    print("KERNEL_OK")
</pallas_src>

<mosaic_0001>
module attributes {stable_mosaic.version = 11 : i64} {
  func.func @_ln_qkvw_kernel(%arg0: i32, %arg1: i32, %arg2: memref<16x32xf32, #tpu.memory_space<vmem>>, %arg3: memref<1x32xf32, #tpu.memory_space<vmem>>, %arg4: memref<1x32xf32, #tpu.memory_space<vmem>>, %arg5: memref<32x128xbf16, #tpu.memory_space<vmem>>, %arg6: memref<16x32xf32, #tpu.memory_space<vmem>>, %arg7: memref<16x128xbf16, #tpu.memory_space<vmem>>, %arg8: memref<16x32xbf16, #tpu.memory_space<vmem>>) attributes {dimension_semantics = [#tpu.dimension_semantics<parallel>, #tpu.dimension_semantics<arbitrary>], iteration_bounds = array<i64: 1, 1>, scalar_prefetch = 0 : i64, scratch_operands = 1 : i64, tpu.core_type = #tpu.core_type<tc>, window_params = [{transform_indices = @transform_0, window_bounds = array<i64: 16, 32>}, {pipeline_mode = #tpu.pipeline_mode<synchronous>, transform_indices = @transform_1, window_bounds = array<i64: 1, 32>}, {pipeline_mode = #tpu.pipeline_mode<synchronous>, transform_indices = @transform_2, window_bounds = array<i64: 1, 32>}, {transform_indices = @transform_3, window_bounds = array<i64: 32, 128>}, {transform_indices = @transform_4, window_bounds = array<i64: 16, 32>}, {transform_indices = @transform_5, window_bounds = array<i64: 16, 128>}]} {
    %c0_i32 = arith.constant 0 : i32
    %0 = arith.cmpi eq, %arg1, %c0_i32 : i32
    %1 = arith.extui %0 : i1 to i32
    %c0_i32_0 = arith.constant 0 : i32
    %2 = arith.cmpi ne, %1, %c0_i32_0 : i32
    scf.if %2 {
      %c0_6 = arith.constant 0 : index
      %c0_7 = arith.constant 0 : index
      %8 = vector.load %arg2[%c0_6, %c0_7] : memref<16x32xf32, #tpu.memory_space<vmem>>, vector<16x32xf32>
      %cst_8 = arith.constant dense<0.000000e+00> : vector<16xf32>
      %9 = vector.multi_reduction <add>, %8, %cst_8 [1] : vector<16x32xf32> to vector<16xf32>
      %10 = vector.shape_cast %9 : vector<16xf32> to vector<16x1xf32>
      %cst_9 = arith.constant 3.200000e+01 : f32
      %11 = vector.broadcast %cst_9 : f32 to vector<16x1xf32>
      %12 = arith.divf %10, %11 : vector<16x1xf32>
      %13 = vector.broadcast %12 : vector<16x1xf32> to vector<16x32xf32>
      %14 = arith.subf %8, %13 : vector<16x32xf32>
      %15 = arith.mulf %14, %14 : vector<16x32xf32>
      %cst_10 = arith.constant dense<0.000000e+00> : vector<16xf32>
      %16 = vector.multi_reduction <add>, %15, %cst_10 [1] : vector<16x32xf32> to vector<16xf32>
      %17 = vector.shape_cast %16 : vector<16xf32> to vector<16x1xf32>
      %cst_11 = arith.constant 3.200000e+01 : f32
      %18 = vector.broadcast %cst_11 : f32 to vector<16x1xf32>
      %19 = arith.divf %17, %18 : vector<16x1xf32>
      %cst_12 = arith.constant 9.99999974E-6 : f32
      %20 = vector.broadcast %cst_12 : f32 to vector<16x1xf32>
      %21 = arith.addf %19, %20 : vector<16x1xf32>
      %22 = math.rsqrt %21 : vector<16x1xf32>
      %23 = vector.broadcast %22 : vector<16x1xf32> to vector<16x32xf32>
      %24 = arith.mulf %14, %23 : vector<16x32xf32>
      %c0_13 = arith.constant 0 : index
      %c0_14 = arith.constant 0 : index
      %25 = vector.load %arg3[%c0_13, %c0_14] : memref<1x32xf32, #tpu.memory_space<vmem>>, vector<1x32xf32>
      %26 = vector.broadcast %25 : vector<1x32xf32> to vector<16x32xf32>
      %27 = arith.mulf %24, %26 : vector<16x32xf32>
      %c0_15 = arith.constant 0 : index
      %c0_16 = arith.constant 0 : index
      %28 = vector.load %arg4[%c0_15, %c0_16] : memref<1x32xf32, #tpu.memory_space<vmem>>, vector<1x32xf32>
      %29 = vector.broadcast %28 : vector<1x32xf32> to vector<16x32xf32>
      %30 = arith.addf %27, %29 : vector<16x32xf32>
      %c0_17 = arith.constant 0 : index
      %c0_18 = arith.constant 0 : index
      %31 = vector.load %arg6[%c0_17, %c0_18] : memref<16x32xf32, #tpu.memory_space<vmem>>, vector<16x32xf32>
      tpu.vector_store %arg6[%c0_17, %c0_18], %30 {strides = array<i32>} : memref<16x32xf32, #tpu.memory_space<vmem>>, vector<16x32xf32>,
      %32 = arith.truncf %30 : vector<16x32xf32> to vector<16x32xbf16>
      %c0_19 = arith.constant 0 : index
      %c0_20 = arith.constant 0 : index
      %33 = vector.load %arg8[%c0_19, %c0_20] : memref<16x32xbf16, #tpu.memory_space<vmem>>, vector<16x32xbf16>
      tpu.vector_store %arg8[%c0_19, %c0_20], %32 {strides = array<i32>} : memref<16x32xbf16, #tpu.memory_space<vmem>>, vector<16x32xbf16>,
    } else {
    }
    %c0 = arith.constant 0 : index
    %c0_1 = arith.constant 0 : index
    %3 = vector.load %arg8[%c0, %c0_1] : memref<16x32xbf16, #tpu.memory_space<vmem>>, vector<16x32xbf16>
    %c0_2 = arith.constant 0 : index
    %c0_3 = arith.constant 0 : index
    %4 = vector.load %arg5[%c0_2, %c0_3] : memref<32x128xbf16, #tpu.memory_space<vmem>>, vector<32x128xbf16>
    %cst = arith.constant dense<0.000000e+00> : vector<16x128xf32>
    %5 = tpu.matmul %3, %4, %cst {dimension_numbers = #tpu.dot_dimension_numbers<[1], [0], [0], [1], [0, 0, 1, 1], [], []>} : vector<16x32xbf16>, vector<32x128xbf16>, vector<16x128xf32> -> vector<16x128xf32>
    %6 = arith.truncf %5 : vector<16x128xf32> to vector<16x128xbf16>
    %c0_4 = arith.constant 0 : index
    %c0_5 = arith.constant 0 : index
    %7 = vector.load %arg7[%c0_4, %c0_5] : memref<16x128xbf16, #tpu.memory_space<vmem>>, vector<16x128xbf16>
    tpu.vector_store %arg7[%c0_4, %c0_5], %6 {strides = array<i32>} : memref<16x128xbf16, #tpu.memory_space<vmem>>, vector<16x128xbf16>,
    return
  }
  func.func @transform_0(%arg0: i32, %arg1: i32) -> (i32, i32) {
    %c0_i32 = arith.constant 0 : i32
    %c0_i32_0 = arith.constant 0 : i32
    return %arg0, %c0_i32 : i32, i32
  }
  func.func @transform_1(%arg0: i32, %arg1: i32) -> (i32, i32) {
    %c0_i32 = arith.constant 0 : i32
    %c0_i32_0 = arith.constant 0 : i32
    %c0_i32_1 = arith.constant 0 : i32
    return %c0_i32, %c0_i32_0 : i32, i32
  }
  func.func @transform_2(%arg0: i32, %arg1: i32) -> (i32, i32) {
    %c0_i32 = arith.constant 0 : i32
    %c0_i32_0 = arith.constant 0 : i32
    %c0_i32_1 = arith.constant 0 : i32
    return %c0_i32, %c0_i32_0 : i32, i32
  }
  func.func @transform_3(%arg0: i32, %arg1: i32) -> (i32, i32) {
    %c0_i32 = arith.constant 0 : i32
    %c0_i32_0 = arith.constant 0 : i32
    return %c0_i32, %arg1 : i32, i32
  }
  func.func @transform_4(%arg0: i32, %arg1: i32) -> (i32, i32) {
    %c0_i32 = arith.constant 0 : i32
    %c0_i32_0 = arith.constant 0 : i32
    return %arg0, %c0_i32 : i32, i32
  }
  func.func @transform_5(%arg0: i32, %arg1: i32) -> (i32, i32) {
    %c0_i32 = arith.constant 0 : i32
    return %arg0, %arg1 : i32, i32
  }
}

</mosaic_0001>

<llo_original>
// kernel: tpu_custom_call.1
$region0: #{tpu_custom_call.1}
  #allocation0 [shape = 'u32[]', space=smem, size = 0x4, offset = 0x4, fixed_abs, tag = 'smem constant byte address 0x4 - core index']
  #allocation1 [shape = 'u32[144,128]{1,0:T(1,128)}', space=vmem, size = 0x12000, scoped, tag = 'internal scratch']
  #allocation2 [shape = 'bf16[16,32]{1,0:T(8,128)(2,1)}', space=vmem, size = 0x1000, scoped, tag = 'scratch operand']
  %s0 = inlined_call_operand.hbm [shape: f32[16,32], index: 0, kind: input, shape index: {}]
  %s1 = inlined_call_operand.vmem [shape: f32[1,32], index: 1, kind: input, shape index: {}]
  %s2 = inlined_call_operand.vmem [shape: f32[1,32], index: 2, kind: input, shape index: {}]
  %s3 = inlined_call_operand.hbm [shape: bf16[32,128], index: 3, kind: input, shape index: {}]
  %s4 = inlined_call_operand.hbm [shape: f32[16,32], index: 4, kind: output, shape index: {0}]
  %s5 = inlined_call_operand.hbm [shape: bf16[16,128], index: 5, kind: output, shape index: {1}]
  %6 = xla_tuple %s4, %s5
  %s7 = sld [smem:[#allocation0]]
  $region46: #{tpu_custom_call.1} parent=0
    _
  %s9 = ssub.s32 1, %s7
  %s10 = scalar_select 0, %s9, %s7
  $region1: #{tpu_custom_call.1} parent=0
    #allocation3 [shape = 'u8[8192]{0}', space=vmem, size = 0x2000, scoped, tag = 'input window, operand 0, single buffered']
    #allocation4 [shape = 's32[1]{0}', space=sflag, size = 0x4, scoped, tag = 'scoped memory for tpu_custom_call.1']
    #allocation5 [shape = 's32[1]{0}', space=sflag, size = 0x4, scoped, tag = 'scoped memory for tpu_custom_call.1']
    #allocation6 [shape = 'u8[8192]{0}', space=vmem, size = 0x2000, scoped, tag = 'input window, operand 3, single buffered']
    #allocation7 [shape = 's32[1]{0}', space=sflag, size = 0x4, scoped, tag = 'scoped memory for tpu_custom_call.1']
    #allocation8 [shape = 'u8[8192]{0}', space=vmem, size = 0x2000, scoped, tag = 'output window, operand 0, single buffered']
    #allocation9 [shape = 'u8[4096]{0}', space=vmem, size = 0x1000, scoped, tag = 'output window, operand 1, single buffered']
    #allocation10 [shape = 's32[1]{0}', space=sflag, size = 0x4, scoped, tag = 'scoped memory for tpu_custom_call.1']
    %11 = vsyncpa [#allocation4], 0
    %12 = vsyncpa [#allocation7], 0
    %13 = vsyncpa [#allocation5], 0
    %14 = vsyncpa [#allocation10], 0
    // Predicated region
    $region2: #{tpu_custom_call.1} parent=1 // pred_check
      _
    $region3: #{tpu_custom_call.1} parent=1 // pred_check_branch
      %16 = sbr.rel (0) target = $region5
    $region4: #{tpu_custom_call.1} parent=1 // pred_region
      %s18 = ssub.s32 256, 256
      %19 = vsyncadd [#allocation4], %s18
      %s20 = sshll.u32 [#allocation3], 4
      %s21 = int_to_ptr.vmem [resolvable:$true] %s20
      %26 = dma.hbm_to_vmem [thread:$0]  %s0, 256, %s21, [#allocation4], 128, 128, 8
    $region5: #{tpu_custom_call.1} parent=1 // pred_fallthru
      _
    // Predicated region
    $region6: #{tpu_custom_call.1} parent=1 // pred_check
      _
    $region7: #{tpu_custom_call.1} parent=1 // pred_check_branch
      %28 = sbr.rel (0) target = $region9
    $region8: #{tpu_custom_call.1} parent=1 // pred_region
      _
    $region9: #{tpu_custom_call.1} parent=1 // pred_fallthru
      _
    // Predicated region
    $region10: #{tpu_custom_call.1} parent=1 // pred_check
      _
    $region11: #{tpu_custom_call.1} parent=1 // pred_check_branch
      %30 = sbr.rel (0) target = $region13
    $region12: #{tpu_custom_call.1} parent=1 // pred_region
      _
    $region13: #{tpu_custom_call.1} parent=1 // pred_fallthru
      _
    // Predicated region
    $region14: #{tpu_custom_call.1} parent=1 // pred_check
      _
    $region15: #{tpu_custom_call.1} parent=1 // pred_check_branch
      %32 = sbr.rel (0) target = $region17
    $region16: #{tpu_custom_call.1} parent=1 // pred_region
      %s34 = ssub.s32 256, 256
      %35 = vsyncadd [#allocation7], %s34
      %s36 = sshll.u32 [#allocation6], 4
      %s37 = int_to_ptr.vmem [resolvable:$true] %s36
      %42 = dma.hbm_to_vmem [thread:$0]  %s3, 256, %s37, [#allocation7], 64, 64, 4
    $region17: #{tpu_custom_call.1} parent=1 // pred_fallthru
      _
    // Predicated region
    $region18: #{tpu_custom_call.1} parent=1 // pred_check
      _
    $region19: #{tpu_custom_call.1} parent=1 // pred_check_branch
      %44 = sbr.rel (0) target = $region21
    $region20: #{tpu_custom_call.1} parent=1 // pred_region
      %45 = dma.done [#allocation4], 256
    $region21: #{tpu_custom_call.1} parent=1 // pred_fallthru
      _
    // Predicated region
    $region22: #{tpu_custom_call.1} parent=1 // pred_check
      _
    $region23: #{tpu_custom_call.1} parent=1 // pred_check_branch
      %47 = sbr.rel (0) target = $region25
    $region24: #{tpu_custom_call.1} parent=1 // pred_region
      %48 = dma.done [#allocation7], 256
    $region25: #{tpu_custom_call.1} parent=1 // pred_fallthru
      _
    %p50 = scmp.eq.s32.totalorder 0, 0
    // Predicated region
    $region26: #{tpu_custom_call.1} parent=1 // pred_check
      %p51 = pneg %p50
    $region27: #{tpu_custom_call.1} parent=1 // pred_check_branch
      %53 = sbr.rel (%p51) target = $region29
    $region28: #{tpu_custom_call.1} parent=1 // pred_region
      %v54 = vld [vmem:[#allocation3] sm:$0xff]
      %v55 = vld [vmem:[#allocation3 + $0x8] sm:$0xff]
      %vm56 = vcmask 261120
      %v57 = vsel %vm56, %v54, 0.0
      %58 = vadd.xlane.f32.xlu0 %v57
      %v59 = vpop.xlane.xlu0 %58
      %v60 = vsel %vm56, %v55, 0.0
      %61 = vadd.xlane.f32.xlu0 %v60
      %v62 = vpop.xlane.xlu0 %61
      %v63 = vrcp.pop 32.0
      %v64 = vmul.f32 %v59, %v63
      %v65 = vmul.f32 %v62, %v63
      %v66 = vsub.f32 %v54, %v64
      %v67 = vsub.f32 %v55, %v65
      %v68 = vmul.f32 %v66, %v66
      %v69 = vmul.f32 %v67, %v67
      %v70 = vsel %vm56, %v68, 0.0
      %71 = vadd.xlane.f32.xlu0 %v70
      %v72 = vpop.xlane.xlu0 %71
      %v73 = vsel %vm56, %v69, 0.0
      %74 = vadd.xlane.f32.xlu0 %v73
      %v75 = vpop.xlane.xlu0 %74
      %v76 = vmul.f32 %v72, %v63
      %v77 = vmul.f32 %v75, %v63
      %v78 = vadd.f32 %v76, 1e-05
      %v79 = vadd.f32 %v77, 1e-05
      %v80 = vrsqrt.pop %v78
      %v81 = vrsqrt.pop %v79
      %v82 = vmul.f32 %v66, %v80
      %v83 = vmul.f32 %v67, %v81
      %v84 = vld [vmem:[%s1] sm:$0x1]
      %v86 = vlaneseq
      %v87 = vshrl.u32 %v86, 7
      %v88 = vsub.s32 0, %v87
      %v89 = vrot.slane %v84, %v88
      %v91 = vmul.f32 %v82, %v89
      %v92 = vmul.f32 %v83, %v89
      %v93 = vld [vmem:[%s2] sm:$0x1]
      %v95 = vlaneseq
      %v96 = vshrl.u32 %v95, 7
      %v97 = vsub.s32 0, %v96
      %v98 = vrot.slane %v93, %v97
      %v100 = vadd.f32 %v91, %v98
      %v101 = vadd.f32 %v92, %v98
      %102 = vst.msk [vmem:[#allocation8] sm:$0xff] %vm56, %v100
      %103 = vst.msk [vmem:[#allocation8 + $0x8] sm:$0xff] %vm56, %v101
      %v104 = vpack.c.bf16 %v101, %v100
      %v106 = vunpack.c.l.b16 %v104
      %v107 = vunpack.c.h.b16 %v104
      %v108 = vpack.c.b16 %v106, %v106
      %v109 = vpack.c.b16 %v107, %v107
      %vm112 = vcmask 257024
      %113 = vst.msk [vmem:[#allocation2] sm:$0xf] %vm112, %v108
      %114 = vst.msk [vmem:[#allocation2 + $0x4] sm:$0xf] %vm112, %v109
    $region29: #{tpu_custom_call.1} parent=1 // pred_fallthru
      _
    %v115 = vld [vmem:[#allocation2] sm:$0xf]
    %v116 = vld [vmem:[#allocation2 + $0x4] sm:$0xf]
    %v117 = vld [vmem:[#allocation6] sm:$0xf]
    %v118 = vld [vmem:[#allocation6 + $0x4] sm:$0xf]
    %v119 = vld [vmem:[#allocation6 + $0x8] sm:$0xf]
    %v120 = vld [vmem:[#allocation6 + $0xc] sm:$0xf]
    %v123 = vunpack.c.l.b16 %v115
    %v124 = vunpack.c.l.b16 %v116
    %v125 = vpack.c.b16 %v124, %v123
    %v130 = vunpack.c.l.b16 %v117
    %v131 = vunpack.c.l.b16 %v118
    %v132 = vunpack.c.l.b16 %v119
    %v133 = vunpack.c.l.b16 %v120
    %v134 = vpack.c.b16 %v131, %v130
    %v135 = vpack.c.b16 %v133, %v132
    %vm138 = vcmask 261120
    %v140 = vsel %vm138, %v125, 0
    %142 = vmatprep.subr.bf16.mxu0 0
    %143 = vmatpush1.bf16.msra.mxu0 0
    %144 = vmatprep.subr.bf16.mxu0 0
    %145 = vmatpush1.bf16.msra.mxu0 0
    %146 = vmatprep.subr.bf16.mxu0 0
    %147 = vmatpush1.bf16.msra.mxu0 0
    %148 = vmatprep.subr.bf16.mxu0 0
    %149 = vmatpush1.bf16.msra.mxu0 0
    %150 = vmatprep.subr.bf16.mxu0 0
    %151 = vmatpush1.bf16.msra.mxu0 0
    %152 = vmatprep.subr.bf16.mxu0 0
    %153 = vmatpush1.bf16.msra.mxu0 0
    %154 = vmatprep.subr.bf16.mxu0 0
    %155 = vmatpush1.bf16.msra.mxu0 %v135
    %156 = vmatprep.subr.bf16.mxu0 0
    %157 = vmatpush1.bf16.msra.mxu0 %v134
    %158 = vmatprep.subr.bf16.mxu0 0
    %159 = vmatpush2.bf16.msra.mxu0 0
    %160 = vmatprep.subr.bf16.mxu0 0
    %161 = vmatpush2.bf16.msra.mxu0 0
    %162 = vmatprep.subr.bf16.mxu0 0
    %163 = vmatpush2.bf16.msra.mxu0 0
    %164 = vmatprep.subr.bf16.mxu0 0
    %165 = vmatpush2.bf16.msra.mxu0 0
    %166 = vmatprep.subr.bf16.mxu0 0
    %167 = vmatpush2.bf16.msra.mxu0 0
    %168 = vmatprep.subr.bf16.mxu0 0
    %169 = vmatpush2.bf16.msra.mxu0 0
    %170 = vmatprep.subr.bf16.mxu0 0
    %171 = vmatpush2.bf16.msra.mxu0 0
    %172 = vmatprep.subr.bf16.mxu0 0
    %173 = vmatpush2.bf16.msra.mxu0 0
    %174 = vmatprep.mubr.bf16.mxu0 0
    %175 = vmatmul.mubr.bf16.gmra.mxu0 %v140
    %v176 = vpop.f32.mrf.mxu0
    %v177 = vadd.f32 0.0, %v176
    %v178 = vpop.f32.mrf.mxu0
    %v179 = vpop.f32.mrf.mxu0
    %v180 = vadd.f32 0.0, %v179
    %v181 = vpop.f32.mrf.mxu0
    %182 = vdwg.mxu0
    %v183 = vpack.c.bf16 %v180, %v177
    %v185 = vunpack.c.l.b16 %v183
    %v186 = vunpack.c.h.b16 %v183
    %v187 = vpack.c.b16 %v185, %v185
    %v188 = vpack.c.b16 %v186, %v186
    %191 = vst [vmem:[#allocation9] sm:$0xf] %v187
    %192 = vst [vmem:[#allocation9 + $0x4] sm:$0xf] %v188
    // Predicated region
    $region30: #{tpu_custom_call.1} parent=1 // pred_check
      _
    $region31: #{tpu_custom_call.1} parent=1 // pred_check_branch
      %194 = sbr.rel (0) target = $region33
    $region32: #{tpu_custom_call.1} parent=1 // pred_region
      %s196 = ssub.s32 256, 256
      %197 = vsyncadd [#allocation5], %s196
      %s198 = sshll.u32 [#allocation8], 4
      %s199 = int_to_ptr.vmem [resolvable:$true] %s198
      %204 = dma.vmem_to_hbm [thread:$0]  %s199, 256, %s4, [#allocation5], 128, 128, 8
    $region33: #{tpu_custom_call.1} parent=1 // pred_fallthru
      _
    // Predicated region
    $region34: #{tpu_custom_call.1} parent=1 // pred_check
      _
    $region35: #{tpu_custom_call.1} parent=1 // pred_check_branch
      %206 = sbr.rel (0) target = $region37
    $region36: #{tpu_custom_call.1} parent=1 // pred_region
      %s208 = ssub.s32 128, 128
      %209 = vsyncadd [#allocation10], %s208
      %s210 = sshll.u32 [#allocation9], 4
      %s211 = int_to_ptr.vmem [resolvable:$true] %s210
      %216 = dma.vmem_to_hbm [thread:$0]  %s211, 128, %s5, [#allocation10], 64, 64, 4
    $region37: #{tpu_custom_call.1} parent=1 // pred_fallthru
      _
    // Predicated region
    $region38: #{tpu_custom_call.1} parent=1 // pred_check
      _
    $region39: #{tpu_custom_call.1} parent=1 // pred_check_branch
      %218 = sbr.rel (0) target = $region41
    $region40: #{tpu_custom_call.1} parent=1 // pred_region
      %219 = dma.done [#allocation5], 256
    $region41: #{tpu_custom_call.1} parent=1 // pred_fallthru
      _
    // Predicated region
    $region42: #{tpu_custom_call.1} parent=1 // pred_check
      _
    $region43: #{tpu_custom_call.1} parent=1 // pred_check_branch
      %221 = sbr.rel (0) target = $region45
    $region44: #{tpu_custom_call.1} parent=1 // pred_region
      %222 = dma.done [#allocation10], 128
    $region45: #{tpu_custom_call.1} parent=1 // pred_fallthru
      _
    %223 = vsyncpa [#allocation4], 1
    %224 = vsyncpa [#allocation7], 1
    %225 = vsyncpa [#allocation5], 1
    %226 = vsyncpa [#allocation10], 1

</llo_original>
